<compile_context>
chip_gen: v7x
topology: tpu7x:2x2x1
jax: 0.10.0
libtpu: 0.0.40
codegen_flags: <defaults>
</compile_context>

<pallas_src>
import jax
import jax.numpy as jnp
from jax.experimental import pallas as pl
from jax.experimental.pallas import tpu as pltpu

_LANE = 128      # f32 vreg lane width
_SUBLANE = 8     # f32 vreg sublane count
_MAX_TILE_ROWS = 256   # 256 rows * 128 lanes = 32768 samples / grid step
                       # -> (5+2+3) * 256*128*4 B * 2 (dbl-buf) ~= 2.6 MiB VMEM


# ----------------------------------------------------------------------------
# Batched kernel: batch on sublane+lane axes, features on the leading axis.
#   raw_ref : (5, R, 128) rows = [x_off_raw, y_off_raw, x_free, y_free, yaw]
#   flg_ref : (2, R, 128) rows = [choose_x_or_y, choose_right_or_left]
#   out_ref : (3, R, 128) rows = [yaw, x, y]
# ----------------------------------------------------------------------------
def _make_batched_kernel(x_min, x_max, y_min, y_max):
    x_min = float(x_min); x_max = float(x_max)
    y_min = float(y_min); y_max = float(y_max)

    def kernel(raw_ref, flg_ref, out_ref):
        x_off = jnp.exp(raw_ref[0])               # EUP
        y_off = jnp.exp(raw_ref[1])
        x_free = raw_ref[2]
        y_free = raw_ref[3]
        cxy = flg_ref[0] >= 0.5                   # torch.where(input >= 0.5, 1, 0)
        crl = flg_ref[1] >= 0.5

        # Direct vsel selects instead of 0/1 mul-add blends.
        x_c = jnp.where(crl, x_max + x_off, x_min - x_off)
        y_c = jnp.where(crl, y_max + y_off, y_min - y_off)

        out_ref[0] = raw_ref[4]                   # yaw
        out_ref[1] = jnp.where(cxy, x_c, x_free)  # x
        out_ref[2] = jnp.where(cxy, y_free, y_c)  # y

    return kernel


def _choose_tiling(rows):
    """Return (padded_rows, tile_rows) for `rows` sublane-rows of 128 samples."""
    if rows <= _MAX_TILE_ROWS:
        if rows % (2 * _SUBLANE) == 0 and rows > _SUBLANE:
            # Two grid steps, no padding: keeps both v7x TensorCores busy.
            return rows, rows // 2
        # Tiny / odd batch: one full-extent block (block dim == array dim, so
        # the (8,128) divisibility rule does not apply).
        return rows, rows
    padded = pl.cdiv(rows, _MAX_TILE_ROWS) * _MAX_TILE_ROWS
    return padded, _MAX_TILE_ROWS


def constrained_output_layer_slab(raw_slab, flags_slab, *,
                                  x_min, x_max, y_min, y_max, tile_rows=None):
    """Producer-layout entry point (zero wrapper relayout).

    raw_slab:   (5, rows, 128) f32   flags_slab: (2, rows, 128) f32
    returns:    (3, rows, 128) f32 rows = [yaw, x, y]
    """
    assert raw_slab.shape[0] == 5 and raw_slab.shape[2] == _LANE
    rows = raw_slab.shape[1]
    assert flags_slab.shape == (2, rows, _LANE)

    if tile_rows is None:
        padded_rows, tile_rows = _choose_tiling(rows)
        assert padded_rows == rows, (
            "rows not tile-friendly; pass tile_rows or use the batched wrapper")
    assert rows % tile_rows == 0
    n_blocks = rows // tile_rows

    n_samples = rows * _LANE
    cost = pl.CostEstimate(flops=12 * n_samples,
                           transcendentals=2 * n_samples,
                           bytes_accessed=40 * n_samples)

    return pl.pallas_call(
        _make_batched_kernel(x_min, x_max, y_min, y_max),
        out_shape=jax.ShapeDtypeStruct((3, rows, _LANE), jnp.float32),
        grid=(n_blocks,),
        in_specs=[pl.BlockSpec((5, tile_rows, _LANE), lambda i: (0, i, 0)),
                  pl.BlockSpec((2, tile_rows, _LANE), lambda i: (0, i, 0))],
        out_specs=pl.BlockSpec((3, tile_rows, _LANE), lambda i: (0, i, 0)),
        compiler_params=pltpu.CompilerParams(dimension_semantics=("parallel",)),
        cost_estimate=cost,
    )(raw_slab, flags_slab)


def constrained_output_layer_batched(raw_output, input_0_1, *,
                                     x_min, x_max, y_min, y_max):
    """Convenience wrapper: raw_output (B,5), input_0_1 (B,2) -> (B,3) [yaw,x,y]."""
    raw_output = jnp.asarray(raw_output, jnp.float32)
    input_0_1 = jnp.asarray(input_0_1, jnp.float32)
    B = raw_output.shape[0]

    rows = pl.cdiv(B, _LANE)
    padded_rows, tile_rows = _choose_tiling(rows)
    b_pad = padded_rows * _LANE

    # TODO(synk): these relayouts (pad + transpose + reshape, and the inverse
    # below) are extra HBM passes over a ~40 B/sample op; the producer network
    # should emit the (feat, rows, 128) slab directly (or fuse the epilogue).
    raw_slab = jnp.pad(raw_output, ((0, b_pad - B), (0, 0))).T.reshape(5, padded_rows, _LANE)
    flg_slab = jnp.pad(input_0_1, ((0, b_pad - B), (0, 0))).T.reshape(2, padded_rows, _LANE)

    out_slab = constrained_output_layer_slab(
        raw_slab, flg_slab,
        x_min=x_min, x_max=x_max, y_min=y_min, y_max=y_max, tile_rows=tile_rows)

    return out_slab.reshape(3, b_pad).T[:B]


# ----------------------------------------------------------------------------
# Single-sample kernel: SMEM scalar input, tiny (3, 128) VMEM output.
# (Launch-overhead dominated; kept minimal. TODO(synk): fuse into producer.)
# ----------------------------------------------------------------------------
def _make_scalar_kernel(x_min, x_max, y_min, y_max):
    x_min = float(x_min); x_max = float(x_max)
    y_min = float(y_min); y_max = float(y_max)

    def kernel(s_ref, out_ref):
        # s_ref: SMEM (8,) f32 = [x_off_raw, y_off_raw, x_free, y_free, yaw, c0, c1, pad]
        ones = jnp.ones((1, _LANE), jnp.float32)
        x_off = jnp.exp(s_ref[0] * ones)
        y_off = jnp.exp(s_ref[1] * ones)
        x_free = s_ref[2] * ones
        y_free = s_ref[3] * ones
        yaw = s_ref[4] * ones
        cxy = (s_ref[5] * ones) >= 0.5
        crl = (s_ref[6] * ones) >= 0.5

        x_c = jnp.where(crl, x_max + x_off, x_min - x_off)
        y_c = jnp.where(crl, y_max + y_off, y_min - y_off)

        out_ref[0:1, :] = yaw
        out_ref[1:2, :] = jnp.where(cxy, x_c, x_free)
        out_ref[2:3, :] = jnp.where(cxy, y_free, y_c)

    return kernel


def constrained_output_layer(raw_output, input_0_1, *, x_min, x_max, y_min, y_max):
    """raw_output: (5,) f32, input_0_1: (2,) f32  ->  (3,) f32 = [yaw, x, y]"""
    raw_output = jnp.asarray(raw_output, jnp.float32)
    input_0_1 = jnp.asarray(input_0_1, jnp.float32)

    # Merge the 7 scalars into one tiny SMEM array (single tiny DMA).
    packed = jnp.concatenate(
        [raw_output, input_0_1, jnp.zeros((1,), jnp.float32)])   # (8,)

    out = pl.pallas_call(
        _make_scalar_kernel(x_min, x_max, y_min, y_max),
        out_shape=jax.ShapeDtypeStruct((3, _LANE), jnp.float32),
        in_specs=[pl.BlockSpec(memory_space=pltpu.SMEM)],
        out_specs=pl.BlockSpec(memory_space=pltpu.VMEM),
    )(packed)

    return out[:, 0]


# ----------------------------------------------------------------------------
# Pure-JAX reference mirroring the PyTorch forward exactly.
# ----------------------------------------------------------------------------
def _reference(raw_output, input_0_1, *, x_min, x_max, y_min, y_max):
    flags = jnp.where(input_0_1 >= 0.5, 1.0, 0.0)
    cxy, crl = flags[0], flags[1]
    x_off = jnp.exp(raw_output[0])
    y_off = jnp.exp(raw_output[1])
    x_c = (x_min - x_off) * (1 - crl) + (x_max + x_off) * crl
    y_c = (y_min - y_off) * (1 - crl) + (y_max + y_off) * crl
    x = cxy * x_c + (1 - cxy) * raw_output[2]
    y = cxy * raw_output[3] + (1 - cxy) * y_c
    return jnp.stack([raw_output[4], x, y], axis=-1)


if __name__ == "__main__":
    key = jax.random.PRNGKey(0)
    k1, k2, k3, k4, k5, k6 = jax.random.split(key, 6)
    bounds = dict(x_min=-1.0, x_max=1.0, y_min=-0.5, y_max=0.5)

    # --- single sample (matches the PyTorch module signature) ---
    raw_output = jax.random.normal(k1, (5,), dtype=jnp.float32)
    input_0_1 = jax.random.uniform(k2, (2,), dtype=jnp.float32)
    out = jax.block_until_ready(
        constrained_output_layer(raw_output, input_0_1, **bounds))
    ref = _reference(raw_output, input_0_1, **bounds)
    assert out.shape == (3,), out.shape
    assert jnp.allclose(out, ref, atol=1e-5, rtol=1e-5), (out, ref)

    # --- batched, non-multiple of 128 (exercises padding, single block) ---
    B1 = 300
    raw_b = jax.random.normal(k3, (B1, 5), dtype=jnp.float32)
    inp_b = jax.random.uniform(k4, (B1, 2), dtype=jnp.float32)
    out_b = jax.block_until_ready(
        constrained_output_layer_batched(raw_b, inp_b, **bounds))
    ref_b = jax.vmap(lambda r, i: _reference(r, i, **bounds))(raw_b, inp_b)
    assert out_b.shape == (B1, 3), out_b.shape
    assert jnp.allclose(out_b, ref_b, atol=1e-5, rtol=1e-5)

    # --- batched, 2048 samples (16 rows -> 2 dense grid steps) ---
    B2 = 2048
    raw_c = jax.random.normal(k5, (B2, 5), dtype=jnp.float32)
    inp_c = jax.random.uniform(k6, (B2, 2), dtype=jnp.float32)
    out_c = jax.block_until_ready(
        constrained_output_layer_batched(raw_c, inp_c, **bounds))
    ref_c = jax.vmap(lambda r, i: _reference(r, i, **bounds))(raw_c, inp_c)
    assert out_c.shape == (B2, 3), out_c.shape
    assert jnp.allclose(out_c, ref_c, atol=1e-5, rtol=1e-5)

    print("KERNEL_OK")
</pallas_src>

<mosaic_0001>
module attributes {stable_mosaic.version = 11 : i64} {
  func.func @kernel(%arg0: memref<8xf32, #tpu.memory_space<smem>>, %arg1: memref<3x128xf32, #tpu.memory_space<vmem>>) attributes {dimension_semantics = [], scalar_prefetch = 0 : i64, scratch_operands = 0 : i64, tpu.core_type = #tpu.core_type<tc>} {
    %cst = arith.constant 1.000000e+00 : f32
    %0 = vector.broadcast %cst : f32 to vector<1x128xf32>
    %c0 = arith.constant 0 : index
    %1 = memref.load %arg0[%c0] : memref<8xf32, #tpu.memory_space<smem>>
    %2 = vector.broadcast %1 : f32 to vector<1x128xf32>
    %3 = arith.mulf %2, %0 : vector<1x128xf32>
    %4 = math.exp %3 : vector<1x128xf32>
    %c1 = arith.constant 1 : index
    %5 = memref.load %arg0[%c1] : memref<8xf32, #tpu.memory_space<smem>>
    %6 = vector.broadcast %5 : f32 to vector<1x128xf32>
    %7 = arith.mulf %6, %0 : vector<1x128xf32>
    %8 = math.exp %7 : vector<1x128xf32>
    %c2 = arith.constant 2 : index
    %9 = memref.load %arg0[%c2] : memref<8xf32, #tpu.memory_space<smem>>
    %10 = vector.broadcast %9 : f32 to vector<1x128xf32>
    %11 = arith.mulf %10, %0 : vector<1x128xf32>
    %c3 = arith.constant 3 : index
    %12 = memref.load %arg0[%c3] : memref<8xf32, #tpu.memory_space<smem>>
    %13 = vector.broadcast %12 : f32 to vector<1x128xf32>
    %14 = arith.mulf %13, %0 : vector<1x128xf32>
    %c4 = arith.constant 4 : index
    %15 = memref.load %arg0[%c4] : memref<8xf32, #tpu.memory_space<smem>>
    %16 = vector.broadcast %15 : f32 to vector<1x128xf32>
    %17 = arith.mulf %16, %0 : vector<1x128xf32>
    %c5 = arith.constant 5 : index
    %18 = memref.load %arg0[%c5] : memref<8xf32, #tpu.memory_space<smem>>
    %19 = vector.broadcast %18 : f32 to vector<1x128xf32>
    %20 = arith.mulf %19, %0 : vector<1x128xf32>
    %cst_0 = arith.constant 5.000000e-01 : f32
    %21 = vector.broadcast %cst_0 : f32 to vector<1x128xf32>
    %22 = arith.cmpf oge, %20, %21 : vector<1x128xf32>
    %c6 = arith.constant 6 : index
    %23 = memref.load %arg0[%c6] : memref<8xf32, #tpu.memory_space<smem>>
    %24 = vector.broadcast %23 : f32 to vector<1x128xf32>
    %25 = arith.mulf %24, %0 : vector<1x128xf32>
    %cst_1 = arith.constant 5.000000e-01 : f32
    %26 = vector.broadcast %cst_1 : f32 to vector<1x128xf32>
    %27 = arith.cmpf oge, %25, %26 : vector<1x128xf32>
    %cst_2 = arith.constant 1.000000e+00 : f32
    %28 = vector.broadcast %cst_2 : f32 to vector<1x128xf32>
    %29 = arith.addf %28, %4 : vector<1x128xf32>
    %cst_3 = arith.constant -1.000000e+00 : f32
    %30 = vector.broadcast %cst_3 : f32 to vector<1x128xf32>
    %31 = arith.subf %30, %4 : vector<1x128xf32>
    %32 = arith.select %27, %29, %31 : vector<1x128xi1>, vector<1x128xf32>
    %cst_4 = arith.constant 5.000000e-01 : f32
    %33 = vector.broadcast %cst_4 : f32 to vector<1x128xf32>
    %34 = arith.addf %33, %8 : vector<1x128xf32>
    %cst_5 = arith.constant -5.000000e-01 : f32
    %35 = vector.broadcast %cst_5 : f32 to vector<1x128xf32>
    %36 = arith.subf %35, %8 : vector<1x128xf32>
    %37 = arith.select %27, %34, %36 : vector<1x128xi1>, vector<1x128xf32>
    %c0_6 = arith.constant 0 : index
    %c0_7 = arith.constant 0 : index
    %38 = vector.load %arg1[%c0_6, %c0_7] : memref<3x128xf32, #tpu.memory_space<vmem>>, vector<1x128xf32>
    tpu.vector_store %arg1[%c0_6, %c0_7], %17 {strides = array<i32>} : memref<3x128xf32, #tpu.memory_space<vmem>>, vector<1x128xf32>,
    %39 = arith.select %22, %32, %11 : vector<1x128xi1>, vector<1x128xf32>
    %c1_8 = arith.constant 1 : index
    %c0_9 = arith.constant 0 : index
    %40 = vector.load %arg1[%c1_8, %c0_9] : memref<3x128xf32, #tpu.memory_space<vmem>>, vector<1x128xf32>
    tpu.vector_store %arg1[%c1_8, %c0_9], %39 {strides = array<i32>} : memref<3x128xf32, #tpu.memory_space<vmem>>, vector<1x128xf32>,
    %41 = arith.select %22, %14, %37 : vector<1x128xi1>, vector<1x128xf32>
    %c2_10 = arith.constant 2 : index
    %c0_11 = arith.constant 0 : index
    %42 = vector.load %arg1[%c2_10, %c0_11] : memref<3x128xf32, #tpu.memory_space<vmem>>, vector<1x128xf32>
    tpu.vector_store %arg1[%c2_10, %c0_11], %41 {strides = array<i32>} : memref<3x128xf32, #tpu.memory_space<vmem>>, vector<1x128xf32>,
    return
  }
}

</mosaic_0001>

<llo_original>
// kernel: tpu_custom_call.1
$region0: #{tpu_custom_call.1}
  #allocation0 [shape = 'u32[]', space=smem, size = 0x4, offset = 0x4, fixed_abs, tag = 'smem constant byte address 0x4 - core index']
  #allocation1 [shape = 'u32[144,128]{1,0:T(1,128)}', space=vmem, size = 0x12000, scoped, tag = 'internal scratch']
  %s0 = inlined_call_operand.hbm [shape: f32[8], index: 0, kind: input, shape index: {}]
  %s1 = inlined_call_operand.hbm [shape: f32[3,128], index: 1, kind: output, shape index: {}]
  %s2 = sld [smem:[#allocation0]]
  $region18: #{tpu_custom_call.1} parent=0
    _
  %s4 = ssub.s32 1, %s2
  %s5 = scalar_select 0, %s4, %s2
  $region1: #{tpu_custom_call.1} parent=0
    #allocation2 [shape = 'u8[512]{0}', space=smem, size = 0x200, scoped, tag = 'input window, operand 0, single buffered']
    #allocation3 [shape = 's32[1]{0}', space=sflag, size = 0x4, scoped, tag = 'scoped memory for tpu_custom_call.1']
    #allocation4 [shape = 's32[1]{0}', space=sflag, size = 0x4, scoped, tag = 'scoped memory for tpu_custom_call.1']
    #allocation5 [shape = 'u8[2048]{0}', space=vmem, size = 0x800, scoped, tag = 'output window, operand 0, single buffered']
    %6 = vsyncpa [#allocation4], 0
    %7 = vsyncpa [#allocation3], 0
    // Predicated region
    $region2: #{tpu_custom_call.1} parent=1 // pred_check
      _
    $region3: #{tpu_custom_call.1} parent=1 // pred_check_branch
      %9 = sbr.rel (0) target = $region5
    $region4: #{tpu_custom_call.1} parent=1 // pred_region
      %s11 = ssub.s32 16, 16
      %12 = vsyncadd [#allocation4], %s11
      %15 = dma.hbm_to_smem %s0, 16, [#allocation2], [#allocation4]
    $region5: #{tpu_custom_call.1} parent=1 // pred_fallthru
      _
    // Predicated region
    $region6: #{tpu_custom_call.1} parent=1 // pred_check
      _
    $region7: #{tpu_custom_call.1} parent=1 // pred_check_branch
      %17 = sbr.rel (0) target = $region9
    $region8: #{tpu_custom_call.1} parent=1 // pred_region
      %18 = dma.done [#allocation4], 16
    $region9: #{tpu_custom_call.1} parent=1 // pred_fallthru
      _
    %19 = sfence
    %s20 = sld [smem:[#allocation2]]
    %v21 = vstv %s20
    %v22 = vmul.f32 %v21, 1.442695
    %v23 = vpow.pop %v22
    %s24 = sld [smem:[#allocation2 + $0x1]]
    %v25 = vstv %s24
    %v26 = vmul.f32 %v25, 1.442695
    %v27 = vpow.pop %v26
    %s28 = sld [smem:[#allocation2 + $0x2]]
    %v29 = vstv %s28
    %s30 = sld [smem:[#allocation2 + $0x3]]
    %v31 = vstv %s30
    %s32 = sld [smem:[#allocation2 + $0x4]]
    %v33 = vstv %s32
    %s34 = sld [smem:[#allocation2 + $0x5]]
    %v35 = vstv %s34
    %vm36 = vcmp.ge.f32.partialorder %v35, 0.5
    %s37 = sld [smem:[#allocation2 + $0x6]]
    %v38 = vstv %s37
    %vm39 = vcmp.ge.f32.partialorder %v38, 0.5
    %v40 = vadd.f32 %v23, 1.0
    %v41 = vsub.f32 -1.0, %v23
    %v42 = vsel %vm39, %v40, %v41
    %v43 = vadd.f32 %v27, 0.5
    %v44 = vsub.f32 -0.5, %v27
    %v45 = vsel %vm39, %v43, %v44
    %46 = vst [vmem:[#allocation5] sm:$0x1] %v33
    %v47 = vsel %vm36, %v42, %v29
    %48 = vst [vmem:[#allocation5 + $0x1] sm:$0x1] %v47
    %v49 = vsel %vm36, %v31, %v45
    %50 = vst [vmem:[#allocation5 + $0x2] sm:$0x1] %v49
    // Predicated region
    $region10: #{tpu_custom_call.1} parent=1 // pred_check
      _
    $region11: #{tpu_custom_call.1} parent=1 // pred_check_branch
      %52 = sbr.rel (0) target = $region13
    $region12: #{tpu_custom_call.1} parent=1 // pred_region
      %s54 = ssub.s32 64, 64
      %55 = vsyncadd [#allocation3], %s54
      %s57 = sshll.u32 [#allocation5], 4
      %s58 = int_to_ptr.vmem [resolvable:$true] %s57
      %60 = dma.vmem_to_hbm [thread:$0]  %s58, 64, %s1, [#allocation3]
    $region13: #{tpu_custom_call.1} parent=1 // pred_fallthru
      _
    // Predicated region
    $region14: #{tpu_custom_call.1} parent=1 // pred_check
      _
    $region15: #{tpu_custom_call.1} parent=1 // pred_check_branch
      %62 = sbr.rel (0) target = $region17
    $region16: #{tpu_custom_call.1} parent=1 // pred_region
      %63 = dma.done [#allocation3], 64
    $region17: #{tpu_custom_call.1} parent=1 // pred_fallthru
      _
    %64 = vsyncpa [#allocation3], 1
    %65 = vsyncpa [#allocation4], 1

</llo_original>
